<compile_context>
chip_gen: v7x
topology: tpu7x:2x2x1
jax: 0.10.0
libtpu: 0.0.40
codegen_flags: <defaults>
</compile_context>

<pallas_src>
import jax
import jax.numpy as jnp
from jax.experimental import pallas as pl
from jax.experimental.pallas import tpu as pltpu


def _encoder_kernel(xh_ref, wlo_ref, whi_ref, out_ref):
    # xh_ref : (S, H_pad)  bf16  -- whole zero-padded signal of one batch element,
    #                              lane axis = half-frame index, sublane axis = sample-in-half
    # wlo_ref: (N, S)      bf16  -- first  half of the Conv1d weight
    # whi_ref: (N, S)      bf16  -- second half of the Conv1d weight
    # out_ref: (N, TF)     f32   -- lane-dense output tile (TF frames)
    tf = out_ref.shape[-1]
    j = pl.program_id(1)
    jj = pl.multiple_of(j * tf, tf)

    # Window of TF+128 halves starting at an aligned lane offset; frame f uses
    # halves f and f+1, so the tile needs halves [jj, jj+TF].
    win = xh_ref[:, pl.ds(jj, tf + 128)]          # (S, TF+128)
    lo = win[:, :tf]                              # halves [jj,   jj+TF)
    hi = win[:, 1:tf + 1]                         # halves [jj+1, jj+TF+1)

    acc = jnp.dot(wlo_ref[...], lo, preferred_element_type=jnp.float32)   # (N, TF)
    acc = acc + jnp.dot(whi_ref[...], hi, preferred_element_type=jnp.float32)
    out_ref[...] = jnp.maximum(acc, 0.0).astype(out_ref.dtype)


def audio_encoder_pallas(x, weight, L, *, frame_tile=256, compute_dtype=jnp.bfloat16):
    """x: (B, T) float32; weight: (N, 1, L) float32 (PyTorch Conv1d weight layout)."""
    B, T = x.shape
    N = weight.shape[0]
    assert L % 2 == 0, "audioEncoder uses stride = L // 2; this kernel requires even L"
    S = L // 2
    assert T >= L, "signal shorter than the Conv1d kernel"
    F = (T - L) // S + 1

    TF = frame_tile
    assert TF % 128 == 0, "frame_tile must be a multiple of 128 for lane-dense stores"
    grid_j = pl.cdiv(F, TF)          # ragged last tile handled by Pallas block masking
    F_pad = grid_j * TF
    H_pad = F_pad + 128              # halves needed by the last window load

    # --- glue: lay the signal out as (B, S, H_pad) bf16 (one fused XLA pass) ---
    need = H_pad * S
    if T >= need:
        xt = x[:, :need]
    else:
        xt = jnp.pad(x, ((0, 0), (0, need - T)))
    xh = jnp.transpose(xt.reshape(B, H_pad, S).astype(compute_dtype), (0, 2, 1))  # (B, S, H_pad)

    w2 = weight.reshape(N, L).astype(compute_dtype)
    w_lo = w2[:, :S]                 # (N, S)
    w_hi = w2[:, S:]                 # (N, S)

    # --- hot path: fused frame extraction + matmul + ReLU ---
    out = pl.pallas_call(
        _encoder_kernel,
        out_shape=jax.ShapeDtypeStruct((B, N, F), jnp.float32),
        grid=(B, grid_j),
        in_specs=[
            pl.BlockSpec((None, S, H_pad), lambda b, j: (b, 0, 0)),   # whole signal of batch b
            pl.BlockSpec((N, S), lambda b, j: (0, 0)),                # loop-invariant weights
            pl.BlockSpec((N, S), lambda b, j: (0, 0)),
        ],
        out_specs=pl.BlockSpec((None, N, TF), lambda b, j: (b, 0, j)),
        compiler_params=pltpu.CompilerParams(
            dimension_semantics=("parallel", "parallel"),
        ),
    )(xh, w_lo, w_hi)
    return out   # already (B, N, F) in PyTorch layout


if __name__ == "__main__":
    # Small shapes consistent with the module (tiny audio clip).
    L = 16            # kernel_size
    N = 32            # number of encoder filters (output channels)
    B = 2             # batch
    S = L // 2
    F = 512           # frames  (chosen so the demo uses full, unmasked tiles)
    T = (F - 1) * S + L   # = 4104 samples

    key = jax.random.PRNGKey(0)
    kx, kw = jax.random.split(key)
    x = jax.random.normal(kx, (B, T), dtype=jnp.float32)
    # Deterministic synthetic Conv1d weight, PyTorch layout (out_ch=N, in_ch=1, kernel=L)
    weight = jax.random.normal(kw, (N, 1, L), dtype=jnp.float32) * (1.0 / jnp.sqrt(L))

    out = audio_encoder_pallas(x, weight, L)
    out = jax.block_until_ready(out)

    # Reference (pure f32 JAX): Conv1d(1, N, L, stride=L//2, bias=False) + ReLU
    starts = jnp.arange(F) * S
    idx = starts[:, None] + jnp.arange(L)[None, :]
    frames = x[:, idx]                                       # (B, F, L)
    ref = jnp.maximum(jnp.einsum("bfl,nl->bnf", frames, weight.reshape(N, L)), 0.0)

    assert out.shape == (B, N, F), out.shape
    assert out.dtype == jnp.float32
    max_err = float(jnp.max(jnp.abs(out - ref)))
    # bf16 operands + f32 accumulation -> small rounding vs the f32 reference
    assert jnp.allclose(out, ref, atol=5e-2, rtol=5e-2), f"mismatch vs reference (max abs err {max_err})"
    print("KERNEL_OK")
</pallas_src>

<mosaic_0001>
module attributes {stable_mosaic.version = 11 : i64} {
  func.func @_encoder_kernel(%arg0: i32, %arg1: i32, %arg2: memref<1x8x640xbf16, #tpu.memory_space<vmem>>, %arg3: memref<32x8xbf16, #tpu.memory_space<vmem>>, %arg4: memref<32x8xbf16, #tpu.memory_space<vmem>>, %arg5: memref<1x32x256xf32, #tpu.memory_space<vmem>>) attributes {dimension_semantics = [#tpu.dimension_semantics<parallel>, #tpu.dimension_semantics<parallel>], iteration_bounds = array<i64: 2, 2>, scalar_prefetch = 0 : i64, scratch_operands = 0 : i64, tpu.core_type = #tpu.core_type<tc>, window_params = [{transform_indices = @transform_0, window_bounds = array<i64: 1, 8, 640>}, {pipeline_mode = #tpu.pipeline_mode<synchronous>, transform_indices = @transform_1, window_bounds = array<i64: 32, 8>}, {pipeline_mode = #tpu.pipeline_mode<synchronous>, transform_indices = @transform_2, window_bounds = array<i64: 32, 8>}, {transform_indices = @transform_3, window_bounds = array<i64: 1, 32, 256>}]} {
    %c256_i32 = arith.constant 256 : i32
    %0 = arith.muli %arg1, %c256_i32 : i32
    %1 = tpu.assume_multiple %0, 256 : i32
    %c0 = arith.constant 0 : index
    %c0_0 = arith.constant 0 : index
    %2 = arith.index_cast %1 : i32 to index
    %3 = vector.load %arg2[%c0, %c0_0, %2] : memref<1x8x640xbf16, #tpu.memory_space<vmem>>, vector<1x8x384xbf16>
    %4 = vector.shape_cast %3 : vector<1x8x384xbf16> to vector<8x384xbf16>
    %5 = vector.extract_strided_slice %4 {offsets = [0, 0], sizes = [8, 256], strides = [1, 1]} : vector<8x384xbf16> to vector<8x256xbf16>
    %6 = vector.extract_strided_slice %4 {offsets = [0, 1], sizes = [8, 256], strides = [1, 1]} : vector<8x384xbf16> to vector<8x256xbf16>
    %c0_1 = arith.constant 0 : index
    %c0_2 = arith.constant 0 : index
    %7 = vector.load %arg3[%c0_1, %c0_2] : memref<32x8xbf16, #tpu.memory_space<vmem>>, vector<32x8xbf16>
    %cst = arith.constant dense<0.000000e+00> : vector<32x256xf32>
    %8 = tpu.matmul %7, %5, %cst {dimension_numbers = #tpu.dot_dimension_numbers<[1], [0], [0], [1], [0, 0, 1, 1], [], []>} : vector<32x8xbf16>, vector<8x256xbf16>, vector<32x256xf32> -> vector<32x256xf32>
    %c0_3 = arith.constant 0 : index
    %c0_4 = arith.constant 0 : index
    %9 = vector.load %arg4[%c0_3, %c0_4] : memref<32x8xbf16, #tpu.memory_space<vmem>>, vector<32x8xbf16>
    %cst_5 = arith.constant dense<0.000000e+00> : vector<32x256xf32>
    %10 = tpu.matmul %9, %6, %cst_5 {dimension_numbers = #tpu.dot_dimension_numbers<[1], [0], [0], [1], [0, 0, 1, 1], [], []>} : vector<32x8xbf16>, vector<8x256xbf16>, vector<32x256xf32> -> vector<32x256xf32>
    %11 = arith.addf %8, %10 : vector<32x256xf32>
    %cst_6 = arith.constant 0.000000e+00 : f32
    %12 = vector.broadcast %cst_6 : f32 to vector<32x256xf32>
    %13 = arith.maximumf %11, %12 : vector<32x256xf32>
    %c0_7 = arith.constant 0 : index
    %c0_8 = arith.constant 0 : index
    %c0_9 = arith.constant 0 : index
    %14 = vector.load %arg5[%c0_7, %c0_8, %c0_9] : memref<1x32x256xf32, #tpu.memory_space<vmem>>, vector<1x32x256xf32>
    %15 = vector.shape_cast %14 : vector<1x32x256xf32> to vector<32x256xf32>
    %16 = vector.shape_cast %13 : vector<32x256xf32> to vector<1x32x256xf32>
    tpu.vector_store %arg5[%c0_7, %c0_8, %c0_9], %16 {strides = array<i32>} : memref<1x32x256xf32, #tpu.memory_space<vmem>>, vector<1x32x256xf32>,
    return
  }
  func.func @transform_0(%arg0: i32, %arg1: i32) -> (i32, i32, i32) {
    %c0_i32 = arith.constant 0 : i32
    %c0_i32_0 = arith.constant 0 : i32
    %c0_i32_1 = arith.constant 0 : i32
    return %arg0, %c0_i32, %c0_i32_0 : i32, i32, i32
  }
  func.func @transform_1(%arg0: i32, %arg1: i32) -> (i32, i32) {
    %c0_i32 = arith.constant 0 : i32
    %c0_i32_0 = arith.constant 0 : i32
    %c0_i32_1 = arith.constant 0 : i32
    return %c0_i32, %c0_i32_0 : i32, i32
  }
  func.func @transform_2(%arg0: i32, %arg1: i32) -> (i32, i32) {
    %c0_i32 = arith.constant 0 : i32
    %c0_i32_0 = arith.constant 0 : i32
    %c0_i32_1 = arith.constant 0 : i32
    return %c0_i32, %c0_i32_0 : i32, i32
  }
  func.func @transform_3(%arg0: i32, %arg1: i32) -> (i32, i32, i32) {
    %c0_i32 = arith.constant 0 : i32
    %c0_i32_0 = arith.constant 0 : i32
    return %arg0, %c0_i32, %arg1 : i32, i32, i32
  }
}

</mosaic_0001>

<llo_original>
// kernel: tpu_custom_call.1
$region0: #{tpu_custom_call.1}
  #allocation0 [shape = 'u32[]', space=smem, size = 0x4, offset = 0x4, fixed_abs, tag = 'smem constant byte address 0x4 - core index']
  #allocation1 [shape = 'u32[144,128]{1,0:T(1,128)}', space=vmem, size = 0x12000, scoped, tag = 'internal scratch']
  %s0 = inlined_call_operand.hbm [shape: bf16[2,8,640], index: 0, kind: input, shape index: {}]
  %s1 = inlined_call_operand.vmem [shape: bf16[32,8], index: 1, kind: input, shape index: {}]
  %s2 = inlined_call_operand.vmem [shape: bf16[32,8], index: 2, kind: input, shape index: {}]
  %s3 = inlined_call_operand.hbm [shape: f32[2,32,512], index: 3, kind: output, shape index: {}]
  %s4 = sld [smem:[#allocation0]]
  $region49: #{tpu_custom_call.1} parent=0
    _
  %s6 = ssub.s32 1, %s4
  %s7 = scalar_select 0, %s6, %s4
  $region1: #{tpu_custom_call.1} parent=0
    #allocation2 [shape = 'u8[20480]{0}', space=vmem, size = 0x5000, scoped, tag = 'input window, operand 0']
    #allocation3 [shape = 's32[2]{0}', space=sflag, size = 0x8, scoped, tag = 'scoped memory for tpu_custom_call.1']
    #allocation4 [shape = 's32[2]{0}', space=sflag, size = 0x8, scoped, tag = 'scoped memory for tpu_custom_call.1']
    #allocation5 [shape = 'u8[65536]{0}', space=vmem, size = 0x10000, scoped, tag = 'output window, operand 0']
    %8 = vsyncpa [#allocation3], 0
    %s9 = scalar_lea.sflag [#allocation3], 1
    %10 = vsyncpa %s9, 0
    %11 = vsyncpa [#allocation4], 0
    %s12 = scalar_lea.sflag [#allocation4], 1
    %13 = vsyncpa %s12, 0
    loop: start=0, step=1, limit=6
    $region2: #{tpu_custom_call.1} parent=1 // loop_pre_header
      _
    $region3: #{tpu_custom_call.1} parent=1 // loop_header
      %s15 = sphi 0, %s19
      %p16 = scmp.ge.s32.totalorder %s15, 6
      %s22 = sphi 0, %s34
      %s23 = sphi 0, %s30
      %s24 = sphi 0, %s22
      %s25 = sphi 0, %s23
      %s26 = sphi 0, %s24
      %s27 = sphi 0, %s25
      %s37 = sphi 0, %s39
      %s40 = sphi 0, %s37
      %s41 = sphi 0, %s40
      %s57 = sphi 0, %s41
      %s61 = sphi 0, %s61
      %s63 = sphi 0, %s61
      %s64 = sphi 0, %s63
      %s78 = sphi 0, %s64
      %s82 = sphi 0, %s82
      %s84 = sphi 0, %s82
      %s85 = sphi 0, %s84
      %s99 = sphi 0, %s85
      %s107 = sphi 0, %s109
      %s110 = sphi 0, %s107
      %s111 = sphi 0, %s110
      %s127 = sphi 0, %s111
    $region4: #{tpu_custom_call.1} parent=1 // loop_header_branch
      %18 = sbr.rel (%p16) target = $region8
    $region5: #{tpu_custom_call.1} parent=1 // loop_body
      %s20 = ssub.s32 %s15, 1
      %s21 = ssub.s32 %s15, 2
      %s28 = sadd.s32 1, %s23
      %p29 = scmp.ge.s32.totalorder %s28, 2
      %s30 = scalar_select %p29, 0, %s28
      %s31 = sadd.s32 1, %s22
      %s32 = scalar_select %p29, %s31, %s22
      %p33 = scmp.ge.s32.totalorder %s32, 2
      %s34 = scalar_select %p33, 0, %s32
      %s35 = ssub.s32 %s22, %s34
      %p36 = scmp.eq.s32.totalorder %s35, 0
      %s38 = sadd.s32 %s37, 1
      %s39 = scalar_select %p36, %s37, %s38
      %p42 = pneg %p36
      %p43 = scmp.eq.s32.totalorder %s15, 3
      %p44 = por %p42, %p43
      %p45 = scmp.ne.s32.totalorder %s37, %s40
      %p46 = scmp.eq.s32.totalorder %s15, 0
      %p47 = por %p45, %p46
      %p48 = scmp.ne.s32.totalorder %s37, %s40
      %p49 = scmp.eq.s32.totalorder %s20, 3
      %p50 = por %p48, %p49
      %p51 = scmp.ne.s32.totalorder %s40, %s41
      %p52 = scmp.eq.s32.totalorder %s20, 0
      %p53 = por %p51, %p52
      %p54 = scmp.ne.s32.totalorder %s40, %s41
      %p55 = scmp.eq.s32.totalorder %s21, 3
      %p56 = por %p54, %p55
      %p58 = scmp.ne.s32.totalorder %s41, %s57
      %p59 = scmp.eq.s32.totalorder %s21, 0
      %p60 = por %p58, %p59
      %s62 = sadd.s32 %s61, 1
      %p65 = scmp.eq.s32.totalorder %s15, 3
      %p66 = scmp.ne.s32.totalorder %s61, %s63
      %p67 = scmp.eq.s32.totalorder %s15, 0
      %p68 = por %p66, %p67
      %p69 = scmp.ne.s32.totalorder %s61, %s63
      %p70 = scmp.eq.s32.totalorder %s20, 3
      %p71 = por %p69, %p70
      %p72 = scmp.ne.s32.totalorder %s63, %s64
      %p73 = scmp.eq.s32.totalorder %s20, 0
      %p74 = por %p72, %p73
      %p75 = scmp.ne.s32.totalorder %s63, %s64
      %p76 = scmp.eq.s32.totalorder %s21, 3
      %p77 = por %p75, %p76
      %p79 = scmp.ne.s32.totalorder %s64, %s78
      %p80 = scmp.eq.s32.totalorder %s21, 0
      %p81 = por %p79, %p80
      %s83 = sadd.s32 %s82, 1
      %p86 = scmp.eq.s32.totalorder %s15, 3
      %p87 = scmp.ne.s32.totalorder %s82, %s84
      %p88 = scmp.eq.s32.totalorder %s15, 0
      %p89 = por %p87, %p88
      %p90 = scmp.ne.s32.totalorder %s82, %s84
      %p91 = scmp.eq.s32.totalorder %s20, 3
      %p92 = por %p90, %p91
      %p93 = scmp.ne.s32.totalorder %s84, %s85
      %p94 = scmp.eq.s32.totalorder %s20, 0
      %p95 = por %p93, %p94
      %p96 = scmp.ne.s32.totalorder %s84, %s85
      %p97 = scmp.eq.s32.totalorder %s21, 3
      %p98 = por %p96, %p97
      %p100 = scmp.ne.s32.totalorder %s85, %s99
      %p101 = scmp.eq.s32.totalorder %s21, 0
      %p102 = por %p100, %p101
      %s103 = ssub.s32 %s22, %s34
      %s104 = ssub.s32 %s23, %s30
      %s105 = sor.u32 %s103, %s104
      %p106 = scmp.eq.s32.totalorder %s105, 0
      %s108 = sadd.s32 %s107, 1
      %s109 = scalar_select %p106, %s107, %s108
      %p112 = pneg %p106
      %p113 = scmp.eq.s32.totalorder %s15, 3
      %p114 = por %p112, %p113
      %p115 = scmp.ne.s32.totalorder %s107, %s110
      %p116 = scmp.eq.s32.totalorder %s15, 0
      %p117 = por %p115, %p116
      %p118 = scmp.ne.s32.totalorder %s107, %s110
      %p119 = scmp.eq.s32.totalorder %s20, 3
      %p120 = por %p118, %p119
      %p121 = scmp.ne.s32.totalorder %s110, %s111
      %p122 = scmp.eq.s32.totalorder %s20, 0
      %p123 = por %p121, %p122
      %p124 = scmp.ne.s32.totalorder %s110, %s111
      %p125 = scmp.eq.s32.totalorder %s21, 3
      %p126 = por %p124, %p125
      %p128 = scmp.ne.s32.totalorder %s111, %s127
      %p129 = scmp.eq.s32.totalorder %s21, 0
      %p130 = por %p128, %p129
      %p131 = scmp.le.s32.totalorder 1, %s15
      %p132 = scmp.lt.s32.totalorder %s15, 5
      %p133 = pnand %p131, %p132
      %p134 = pneg %p133
      // Predicated region
      $region9: #{tpu_custom_call.1} parent=5 // pred_check
        _
      $region10: #{tpu_custom_call.1} parent=5 // pred_check_branch
        %136 = sbr.rel (%p133) target = $region12
      $region11: #{tpu_custom_call.1} parent=5 // pred_region
        %s137 = ssub.s32 %s15, 1
        // Predicated region
        $region13: #{tpu_custom_call.1} parent=11 // pred_check
          %p138 = pneg %p74
        $region14: #{tpu_custom_call.1} parent=11 // pred_check_branch
          %140 = sbr.rel (%p138) target = $region16
        $region15: #{tpu_custom_call.1} parent=11 // pred_region
          _
        $region16: #{tpu_custom_call.1} parent=11 // pred_fallthru
          _
        // Predicated region
        $region17: #{tpu_custom_call.1} parent=11 // pred_check
          %p141 = pneg %p95
        $region18: #{tpu_custom_call.1} parent=11 // pred_check_branch
          %143 = sbr.rel (%p141) target = $region20
        $region19: #{tpu_custom_call.1} parent=11 // pred_region
          _
        $region20: #{tpu_custom_call.1} parent=11 // pred_fallthru
          _
      $region12: #{tpu_custom_call.1} parent=5 // pred_fallthru
        _
      %p144 = scmp.lt.s32.totalorder %s15, 4
      // Predicated region
      $region21: #{tpu_custom_call.1} parent=5 // pred_check
        %p145 = pneg %p144
      $region22: #{tpu_custom_call.1} parent=5 // pred_check_branch
        %147 = sbr.rel (%p145) target = $region24
      $region23: #{tpu_custom_call.1} parent=5 // pred_region
        // Predicated region
        $region25: #{tpu_custom_call.1} parent=23 // pred_check
          %p148 = pneg %p47
        $region26: #{tpu_custom_call.1} parent=23 // pred_check_branch
          %150 = sbr.rel (%p148) target = $region28
        $region27: #{tpu_custom_call.1} parent=23 // pred_region
          %s151 = sand.u32 %s37, 1
          %s152 = scalar_lea.sflag [#allocation3], %s151
          %s153 = sand.u32 %s37, 1
          %s154 = smul.addr %s153, 20
          %s155 = scalar_lea.vmem [#allocation2], %s154
          %s157 = ssub.s32 320, 320
          %158 = vsyncadd %s152, %s157
          %s159 = smul.addr %s22, 5
          %s160 = smul.addr %s159, 64
          %s161 = scalar_lea.hbm %s0, %s160
          %s163 = sshll.u32 %s155, 4
          %s164 = int_to_ptr.vmem [resolvable:$true] %s163
          %166 = dma.hbm_to_vmem [thread:$0]  %s161, 320, %s164, %s152
        $region28: #{tpu_custom_call.1} parent=23 // pred_fallthru
          _
      $region24: #{tpu_custom_call.1} parent=5 // pred_fallthru
        _
      %p167 = scmp.le.s32.totalorder 1, %s15
      %p168 = scmp.lt.s32.totalorder %s15, 5
      %p169 = pnand %p167, %p168
      %p170 = pneg %p169
      // Predicated region
      $region29: #{tpu_custom_call.1} parent=5 // pred_check
        _
      $region30: #{tpu_custom_call.1} parent=5 // pred_check_branch
        %172 = sbr.rel (%p169) target = $region32
      $region31: #{tpu_custom_call.1} parent=5 // pred_region
        %s173 = ssub.s32 %s15, 1
        %s174 = sand.u32 %s40, 1
        %s175 = scalar_lea.sflag [#allocation3], %s174
        %s176 = sand.u32 %s40, 1
        %s177 = smul.addr %s176, 20
        %s178 = scalar_lea.vmem [#allocation2], %s177
        // Predicated region
        $region33: #{tpu_custom_call.1} parent=31 // pred_check
          %p179 = pneg %p53
        $region34: #{tpu_custom_call.1} parent=31 // pred_check_branch
          %181 = sbr.rel (%p179) target = $region36
        $region35: #{tpu_custom_call.1} parent=31 // pred_region
          %182 = dma.done %s175, 320
        $region36: #{tpu_custom_call.1} parent=31 // pred_fallthru
          _
        %s183 = sand.u32 %s40, 1
        %s184 = scalar_lea.sflag [#allocation3], %s183
        %s185 = sand.u32 %s40, 1
        %s186 = smul.addr %s185, 20
        %s187 = scalar_lea.vmem [#allocation2], %s186
        %p188 = pneg %p53
        %p189 = pneg %p50
        %p190 = pneg %p74
        %p191 = pneg %p71
        %p192 = pneg %p95
        %p193 = pneg %p92
        %p194 = pneg %p123
        %p195 = pneg %p120
        %s196 = sand.u32 %s110, 1
        %s197 = scalar_lea.sflag [#allocation4], %s196
        %s198 = sand.u32 %s110, 1
        %s199 = smul.addr %s198, 64
        %s200 = scalar_lea.vmem [#allocation5], %s199
        %s201 = smul.u32 2, %s25
        %s203 = smul.u32 %s25, 256
        %s204 = sshra.s32 %s203, 7
        %s205 = sand.u32 %s203, 127
        %s206 = smul.addr %s204, 4
        %s207 = scalar_lea.vmem %s178, %s206 [#allocation2]
        %v208 = vld [vmem:[%s207] sm:$0xff]
        %v209 = vld [vmem:[%s207 + $0x8] sm:$0xf]
        %v210 = vld [vmem:[%s1] sm:$0xf]
        %v211 = vld [vmem:[%s1 + $0x4] sm:$0xf]
        %v212 = vld [vmem:[%s1 + $0x8] sm:$0xf]
        %v213 = vld [vmem:[%s1 + $0xc] sm:$0xf]
        %v214 = vld [vmem:[%s2] sm:$0xf]
        %v215 = vld [vmem:[%s2 + $0x4] sm:$0xf]
        %v216 = vld [vmem:[%s2 + $0x8] sm:$0xf]
        %v217 = vld [vmem:[%s2 + $0xc] sm:$0xf]
        %v222 = vunpack.c.l.b16 %v214
        %v223 = vunpack.c.l.b16 %v215
        %v224 = vunpack.c.l.b16 %v216
        %v225 = vunpack.c.l.b16 %v217
        %v226 = vpack.c.b16 %v223, %v222
        %v227 = vpack.c.b16 %v225, %v224
        %v230 = vunpack.c.l.b16 %v208
        %v231 = vunpack.c.h.b16 %v208
        %v232 = vunpack.c.l.b16 %v209
        %v233 = vpack.c.b16 %v230, %v230
        %v234 = vpack.c.b16 %v231, %v231
        %v235 = vpack.c.b16 %v232, %v232
        %236 = vrot.lane.b32.xlu0 %v233, 127
        %v237 = vpop.permute.xlu0 %236
        %238 = vrot.lane.b32.xlu0 %v234, 127
        %v239 = vpop.permute.xlu0 %238
        %240 = vrot.lane.b32.xlu0 %v235, 127
        %v241 = vpop.permute.xlu0 %240
        %vm242 = vcmask 1039360
        %v243 = vsel %vm242, %v237, %v239
        %v244 = vsel %vm242, %v239, %v241
        %vm245 = vcmask 64512
        %v247 = vsel %vm245, %v226, 0
        %v250 = vsel %vm245, %v227, 0
        %vm252 = vcmask 1043456
        %v254 = vsel %vm252, %v243, 0
        %v257 = vsel %vm252, %v244, 0
        %259 = vmatprep.subr.bf16.mxu0 %v257
        %260 = vmatpush1.bf16.msra.mxu0 %v254
        %261 = vmatprep.subr.bf16.mxu0 0
        %262 = vmatpush1.bf16.msra.mxu0 0
        %263 = vmatprep.subr.bf16.mxu0 0
        %264 = vmatpush1.bf16.msra.mxu0 0
        %265 = vmatprep.subr.bf16.mxu0 0
        %266 = vmatpush1.bf16.msra.mxu0 0
        %267 = vmatprep.subr.bf16.mxu0 0
        %268 = vmatpush1.bf16.msra.mxu0 0
        %269 = vmatprep.subr.bf16.mxu0 0
        %270 = vmatpush1.bf16.msra.mxu0 0
        %271 = vmatprep.subr.bf16.mxu0 0
        %272 = vmatpush1.bf16.msra.mxu0 0
        %273 = vmatprep.subr.bf16.mxu0 0
        %274 = vmatpush1.bf16.msra.mxu0 0
        %275 = vmatprep.subr.bf16.mxu0 0
        %276 = vmatpush1.bf16.msra.mxu0 0
        %277 = vmatprep.subr.bf16.mxu0 0
        %278 = vmatpush1.bf16.msra.mxu0 0
        %279 = vmatprep.subr.bf16.mxu0 0
        %280 = vmatpush1.bf16.msra.mxu0 0
        %281 = vmatprep.subr.bf16.mxu0 0
        %282 = vmatpush1.bf16.msra.mxu0 0
        %283 = vmatprep.subr.bf16.mxu0 0
        %284 = vmatpush1.bf16.msra.mxu0 0
        %285 = vmatprep.subr.bf16.mxu0 0
        %286 = vmatpush1.bf16.msra.mxu0 0
        %287 = vmatprep.subr.bf16.mxu0 0
        %288 = vmatpush1.bf16.msra.mxu0 0
        %289 = vmatprep.subr.bf16.mxu0 0
        %290 = vmatpush1.bf16.msra.mxu0 0
        %291 = vmatprep.mubr.bf16.mxu0 0
        %292 = vmatmul.mubr.bf16.gmra.mrb[0].mxu0 %v247
        %v293 = vpop.f32.mrb[0].mxu0
        %v294 = vadd.f32 0.0, %v293
        %v295 = vpop.f32.mrb[0].mxu0
        %v296 = vadd.f32 0.0, %v295
        %v297 = vpop.f32.mrb[0].mxu0
        %v298 = vadd.f32 0.0, %v297
        %v299 = vpop.f32.mrb[0].mxu0
        %v300 = vadd.f32 0.0, %v299
        %301 = vmatprep.mubr.bf16.mxu0 0
        %302 = vmatmul.mubr.bf16.gmra.mrb[0].mxu0 %v250
        %v303 = vpop.f32.mrb[0].mxu0
        %v304 = vadd.f32 0.0, %v303
        %v305 = vpop.f32.mrb[0].mxu0
        %v306 = vadd.f32 0.0, %v305
        %v307 = vpop.f32.mrb[0].mxu0
        %v308 = vadd.f32 0.0, %v307
        %v309 = vpop.f32.mrb[0].mxu0
        %v310 = vadd.f32 0.0, %v309
        %311 = vdwg.mxu0
        %v316 = vunpack.c.l.b16 %v210
        %v317 = vunpack.c.l.b16 %v211
        %v318 = vunpack.c.l.b16 %v212
        %v319 = vunpack.c.l.b16 %v213
        %v320 = vpack.c.b16 %v317, %v316
        %v321 = vpack.c.b16 %v319, %v318
        %v323 = vsel %vm245, %v320, 0
        %v326 = vsel %vm245, %v321, 0
        %v329 = vsel %vm252, %v233, 0
        %v332 = vsel %vm252, %v234, 0
        %334 = vmatprep.subr.bf16.mxu0 %v332
        %335 = vmatpush1.bf16.msra.mxu0 %v329
        %336 = vmatprep.subr.bf16.mxu0 0
        %337 = vmatpush1.bf16.msra.mxu0 0
        %338 = vmatprep.subr.bf16.mxu0 0
        %339 = vmatpush1.bf16.msra.mxu0 0
        %340 = vmatprep.subr.bf16.mxu0 0
        %341 = vmatpush1.bf16.msra.mxu0 0
        %342 = vmatprep.subr.bf16.mxu0 0
        %343 = vmatpush1.bf16.msra.mxu0 0
        %344 = vmatprep.subr.bf16.mxu0 0
        %345 = vmatpush1.bf16.msra.mxu0 0
        %346 = vmatprep.subr.bf16.mxu0 0
        %347 = vmatpush1.bf16.msra.mxu0 0
        %348 = vmatprep.subr.bf16.mxu0 0
        %349 = vmatpush1.bf16.msra.mxu0 0
        %350 = vmatprep.subr.bf16.mxu0 0
        %351 = vmatpush1.bf16.msra.mxu0 0
        %352 = vmatprep.subr.bf16.mxu0 0
        %353 = vmatpush1.bf16.msra.mxu0 0
        %354 = vmatprep.subr.bf16.mxu0 0
        %355 = vmatpush1.bf16.msra.mxu0 0
        %356 = vmatprep.subr.bf16.mxu0 0
        %357 = vmatpush1.bf16.msra.mxu0 0
        %358 = vmatprep.subr.bf16.mxu0 0
        %359 = vmatpush1.bf16.msra.mxu0 0
        %360 = vmatprep.subr.bf16.mxu0 0
        %361 = vmatpush1.bf16.msra.mxu0 0
        %362 = vmatprep.subr.bf16.mxu0 0
        %363 = vmatpush1.bf16.msra.mxu0 0
        %364 = vmatprep.subr.bf16.mxu0 0
        %365 = vmatpush1.bf16.msra.mxu0 0
        %366 = vmatprep.mubr.bf16.mxu0 0
        %367 = vmatmul.mubr.bf16.gmra.mrb[0].mxu0 %v323
        %v368 = vpop.f32.mrb[0].mxu0
        %v369 = vadd.f32 %v294, %v368
        %v370 = vpop.f32.mrb[0].mxu0
        %v371 = vadd.f32 %v296, %v370
        %v372 = vpop.f32.mrb[0].mxu0
        %v373 = vadd.f32 %v298, %v372
        %v374 = vpop.f32.mrb[0].mxu0
        %v375 = vadd.f32 %v300, %v374
        %376 = vmatprep.mubr.bf16.mxu0 0
        %377 = vmatmul.mubr.bf16.gmra.mrb[0].mxu0 %v326
        %v378 = vpop.f32.mrb[0].mxu0
        %v379 = vadd.f32 %v304, %v378
        %v380 = vpop.f32.mrb[0].mxu0
        %v381 = vadd.f32 %v306, %v380
        %v382 = vpop.f32.mrb[0].mxu0
        %v383 = vadd.f32 %v308, %v382
        %v384 = vpop.f32.mrb[0].mxu0
        %v385 = vadd.f32 %v310, %v384
        %386 = vdwg.mxu0
        %v387 = vmax.f32 %v369, 0.0
        %v388 = vmax.f32 %v371, 0.0
        %v389 = vmax.f32 %v373, 0.0
        %v390 = vmax.f32 %v375, 0.0
        %v391 = vmax.f32 %v379, 0.0
        %v392 = vmax.f32 %v381, 0.0
        %v393 = vmax.f32 %v383, 0.0
        %v394 = vmax.f32 %v385, 0.0
        %395 = vst [vmem:[%s200] sm:$0xff] %v387
        %396 = vst [vmem:[%s200 + $0x8] sm:$0xff] %v388
        %397 = vst [vmem:[%s200 + $0x10] sm:$0xff] %v389
        %398 = vst [vmem:[%s200 + $0x18] sm:$0xff] %v390
        %399 = vst [vmem:[%s200 + $0x20] sm:$0xff] %v391
        %400 = vst [vmem:[%s200 + $0x28] sm:$0xff] %v392
        %401 = vst [vmem:[%s200 + $0x30] sm:$0xff] %v393
        %402 = vst [vmem:[%s200 + $0x38] sm:$0xff] %v394
        %s403 = sand.u32 %s110, 1
        %s404 = scalar_lea.sflag [#allocation4], %s403
        %s405 = sand.u32 %s110, 1
        %s406 = smul.addr %s405, 64
        %s407 = scalar_lea.vmem [#allocation5], %s406
        // Predicated region
        $region37: #{tpu_custom_call.1} parent=31 // pred_check
          %p408 = pneg %p120
        $region38: #{tpu_custom_call.1} parent=31 // pred_check_branch
          %410 = sbr.rel (%p408) target = $region40
        $region39: #{tpu_custom_call.1} parent=31 // pred_region
          %s411 = smul.u32 2, %s25
          %s413 = ssub.s32 1024, 1024
          %414 = vsyncadd %s404, %s413
          %s415 = smul.addr %s24, 16
          %s416 = sadd.s32 %s411, %s415
          %s417 = smul.addr %s416, 128
          %s418 = scalar_lea.hbm %s3, %s417
          %s419 = sshll.u32 %s407, 4
          %s420 = int_to_ptr.vmem [resolvable:$true] %s419
          %425 = dma.vmem_to_hbm [thread:$0]  %s420, 1024, %s418, %s404, 256, 512, 16
        $region40: #{tpu_custom_call.1} parent=31 // pred_fallthru
          _
      $region32: #{tpu_custom_call.1} parent=5 // pred_fallthru
        _
      %p426 = scmp.le.s32.totalorder 2, %s15
      // Predicated region
      $region41: #{tpu_custom_call.1} parent=5 // pred_check
        %p427 = pneg %p426
      $region42: #{tpu_custom_call.1} parent=5 // pred_check_branch
        %429 = sbr.rel (%p427) target = $region44
      $region43: #{tpu_custom_call.1} parent=5 // pred_region
        %s430 = ssub.s32 %s15, 2
        // Predicated region
        $region45: #{tpu_custom_call.1} parent=43 // pred_check
          %p431 = pneg %p126
        $region46: #{tpu_custom_call.1} parent=43 // pred_check_branch
          %433 = sbr.rel (%p431) target = $region48
        $region47: #{tpu_custom_call.1} parent=43 // pred_region
          %s434 = sand.u32 %s111, 1
          %s435 = scalar_lea.sflag [#allocation4], %s434
          %s436 = sand.u32 %s111, 1
          %s437 = smul.addr %s436, 64
          %s438 = scalar_lea.vmem [#allocation5], %s437
          %439 = dma.done %s435, 1024
        $region48: #{tpu_custom_call.1} parent=43 // pred_fallthru
          _
      $region44: #{tpu_custom_call.1} parent=5 // pred_fallthru
        _
    $region6: #{tpu_custom_call.1} parent=1 // loop_footer
      %s19 = sadd.s32 1, %s15
    $region7: #{tpu_custom_call.1} parent=1 // loop_footer_branch
      %14 = sbr.rel target = $region3
    $region8: #{tpu_custom_call.1} parent=1 // loop_exit
      _
    %440 = vsyncpa [#allocation3], 1
    %s441 = scalar_lea.sflag [#allocation3], 1
    %442 = vsyncpa %s441, 1
    %443 = vsyncpa [#allocation4], 1
    %s444 = scalar_lea.sflag [#allocation4], 1
    %445 = vsyncpa %s444, 1

</llo_original>
